<compile_context>
chip_gen: v6e
topology: v6e:2x2x1
jax: 0.10.0
libtpu: 0.0.40
codegen_flags: <defaults>
</compile_context>

<pallas_src>
import functools

import jax
import jax.numpy as jnp
from jax.experimental import pallas as pl
from jax.experimental.pallas import tpu as pltpu

N_HIDDEN = 16
N_LATENT = 5
N_WINDOW = 5

# Row layout of the small-weight slab (96 rows x 32 cols), 8-aligned blocks.
_ROW_WE2 = 0     # (16, 16)
_ROW_WE3 = 16    # (16, 5)
_ROW_WDF1 = 32   # (5, 32)   = [wd1_1 | wd2_1]
_ROW_WDF2 = 40   # (32, 32)  = blockdiag(wd1_2, wd2_2)
_ROW_WD21 = 72   # (5, 16)
_ROW_WD22 = 80   # (16, 16)
_WS_ROWS = 96


def _usad_kernel(x_ref, we1_ref, ws_ref, bs_ref, wo_ref, o_ref):
    H, L = N_HIDDEN, N_LATENT

    x = x_ref[...]                      # (TB, n_pad)
    we1 = we1_ref[...]                  # (n_pad, H)   encoder layer 1 (rows >= n are 0)
    ws = ws_ref[...]                    # (96, 2H)     small-weight slab
    bs = bs_ref[...]                    # (8, 2H)      bias slab
    wo = wo_ref[...]                    # (2H+2, n_pad) output-layer slab

    we2 = ws[_ROW_WE2:_ROW_WE2 + H, 0:H]
    we3 = ws[_ROW_WE3:_ROW_WE3 + H, 0:L]
    wdf1 = ws[_ROW_WDF1:_ROW_WDF1 + L, :]          # (L, 2H)
    wdf2 = ws[_ROW_WDF2:_ROW_WDF2 + 2 * H, :]      # (2H, 2H)
    wd2_1 = ws[_ROW_WD21:_ROW_WD21 + L, 0:H]
    wd2_2 = ws[_ROW_WD22:_ROW_WD22 + H, 0:H]

    be1 = bs[0:1, 0:H]
    be2 = bs[1:2, 0:H]
    be3 = bs[2:3, 0:L]
    bdf1 = bs[3:4, :]
    bdf2 = bs[4:5, :]
    bd2_1 = bs[5:6, 0:H]
    bd2_2 = bs[6:7, 0:H]

    wd1_3 = wo[0:H, :]
    wd2_3 = wo[H:2 * H, :]
    bd1_3 = wo[2 * H:2 * H + 1, :]
    bd2_3 = wo[2 * H + 1:2 * H + 2, :]

    def lin(h, w, b):
        return jnp.dot(h, w, preferred_element_type=jnp.float32) + b

    def relu(v):
        return jnp.maximum(v, 0.0)

    def encoder(h):
        h = relu(lin(h, we1, be1))
        h = relu(lin(h, we2, be2))
        return relu(lin(h, we3, be3))   # (TB, L)

    # ---- pass 1: encoder, decoder1+decoder2 layers 1-2 fused, separate heads ----
    z = encoder(x)                                          # (TB, L)
    d = relu(lin(z, wdf1, bdf1))                            # (TB, 2H)
    d = relu(lin(d, wdf2, bdf2))                            # (TB, 2H)
    ae1 = jax.nn.sigmoid(lin(d[:, 0:H], wd1_3, bd1_3))      # (TB, n_pad)
    ae2 = jax.nn.sigmoid(lin(d[:, H:2 * H], wd2_3, bd2_3))  # (TB, n_pad)

    # ---- pass 2: encoder(ae1) -> decoder2 (serial dependency, cannot fuse) ----
    z2 = encoder(ae1)
    e = relu(lin(z2, wd2_1, bd2_1))
    e = relu(lin(e, wd2_2, bd2_2))
    ae2ae1 = jax.nn.sigmoid(lin(e, wd2_3, bd2_3))           # (TB, n_pad)

    # Single lane-dense, unmasked full-block store.
    o_ref[...] = jnp.concatenate([ae1, ae2, ae2ae1], axis=1).astype(o_ref.dtype)


def _cost_estimate(b, n_pad):
    H, L = N_HIDDEN, N_LATENT
    enc = n_pad * H + H * H + H * L
    dec12 = L * 2 * H + (2 * H) * (2 * H)
    heads = 3 * H * n_pad
    dec2 = L * H + H * H
    flops = 2 * b * (2 * enc + dec12 + dec2 + heads)
    transc = 3 * b * n_pad
    bytes_accessed = 4 * (b * n_pad + b * 3 * n_pad
                          + n_pad * H + _WS_ROWS * 2 * H + 8 * 2 * H
                          + (2 * H + 2) * n_pad)
    return pl.CostEstimate(flops=flops, transcendentals=transc,
                           bytes_accessed=bytes_accessed)


def _usad_call_impl(x, we1p, ws, bsl, wo, tile_b):
    """x: (B_pad, n_pad) f32; returns (B_pad, 3*n_pad) f32."""
    b_pad, n_pad = x.shape
    num_tiles = b_pad // tile_b
    out_shape = jax.ShapeDtypeStruct((b_pad, 3 * n_pad), jnp.float32)
    cost = _cost_estimate(b_pad, n_pad)

    if num_tiles <= 1:
        # Single-block call: no grid, no index maps, whole operands in VMEM.
        vmem = pl.BlockSpec(memory_space=pltpu.MemorySpace.VMEM)
        return pl.pallas_call(
            _usad_kernel,
            out_shape=out_shape,
            in_specs=[vmem, vmem, vmem, vmem, vmem],
            out_specs=vmem,
            cost_estimate=cost,
        )(x, we1p, ws, bsl, wo)

    # Batched path: tile the batch with a parallel grid axis (megacore-friendly).
    return pl.pallas_call(
        _usad_kernel,
        out_shape=out_shape,
        grid=(num_tiles,),
        in_specs=[
            pl.BlockSpec((tile_b, n_pad), lambda i: (i, 0)),
            pl.BlockSpec(we1p.shape, lambda i: (0, 0)),
            pl.BlockSpec(ws.shape, lambda i: (0, 0)),
            pl.BlockSpec(bsl.shape, lambda i: (0, 0)),
            pl.BlockSpec(wo.shape, lambda i: (0, 0)),
        ],
        out_specs=pl.BlockSpec((tile_b, 3 * n_pad), lambda i: (i, 0)),
        compiler_params=pltpu.CompilerParams(dimension_semantics=("parallel",)),
        cost_estimate=cost,
    )(x, we1p, ws, bsl, wo)


def prepare_params(params, feats):
    """One-time packing of the 18 USAD tensors into 4 kernel operands.

    Runs once per parameter set -- keep OUT of the per-call hot path.
    Returns (we1_pad, w_small, b_small, w_out)."""
    n = feats * N_WINDOW
    n_pad = ((n + 127) // 128) * 128
    H, L = N_HIDDEN, N_LATENT

    (we1, be1, we2, be2, we3, be3,
     wd1_1, bd1_1, wd1_2, bd1_2, wd1_3, bd1_3,
     wd2_1, bd2_1, wd2_2, bd2_2, wd2_3, bd2_3) = [
        jnp.asarray(a, jnp.float32) for a in params]

    # Encoder layer-1 weight, feature dim zero-padded to n_pad rows.
    we1p = jnp.zeros((n_pad, H), jnp.float32).at[:n, :].set(we1)

    # Small-weight slab (8-aligned row blocks).
    ws = jnp.zeros((_WS_ROWS, 2 * H), jnp.float32)
    ws = ws.at[_ROW_WE2:_ROW_WE2 + H, 0:H].set(we2)
    ws = ws.at[_ROW_WE3:_ROW_WE3 + H, 0:L].set(we3)
    ws = ws.at[_ROW_WDF1:_ROW_WDF1 + L, :].set(
        jnp.concatenate([wd1_1, wd2_1], axis=1))
    ws = ws.at[_ROW_WDF2:_ROW_WDF2 + H, 0:H].set(wd1_2)
    ws = ws.at[_ROW_WDF2 + H:_ROW_WDF2 + 2 * H, H:2 * H].set(wd2_2)
    ws = ws.at[_ROW_WD21:_ROW_WD21 + L, 0:H].set(wd2_1)
    ws = ws.at[_ROW_WD22:_ROW_WD22 + H, 0:H].set(wd2_2)

    # Bias slab: one bias per sublane row.
    bsl = jnp.zeros((8, 2 * H), jnp.float32)
    bsl = bsl.at[0, 0:H].set(be1[0])
    bsl = bsl.at[1, 0:H].set(be2[0])
    bsl = bsl.at[2, 0:L].set(be3[0])
    bsl = bsl.at[3, :].set(jnp.concatenate([bd1_1, bd2_1], axis=1)[0])
    bsl = bsl.at[4, :].set(jnp.concatenate([bd1_2, bd2_2], axis=1)[0])
    bsl = bsl.at[5, 0:H].set(bd2_1[0])
    bsl = bsl.at[6, 0:H].set(bd2_2[0])

    # Output-layer slab: wd1_3, wd2_3 and their biases, lane dim padded to n_pad.
    wo = jnp.zeros((2 * H + 2, n_pad), jnp.float32)
    wo = wo.at[0:H, :n].set(wd1_3)
    wo = wo.at[H:2 * H, :n].set(wd2_3)
    wo = wo.at[2 * H, :n].set(bd1_3[0])
    wo = wo.at[2 * H + 1, :n].set(bd2_3[0])

    return (we1p, ws, bsl, wo)


@functools.partial(jax.jit, static_argnames=("feats",))
def usad_forward(g, prepped, *, feats):
    """Matches USAD.forward(g): single window -> (ae1, ae2, ae2ae1), each (n,)."""
    we1p, ws, bsl, wo = prepped
    n = feats * N_WINDOW
    n_pad = we1p.shape[0]
    x = jnp.zeros((8, n_pad), jnp.float32)            # pad batch to one sublane tile
    x = x.at[0, :n].set(g.reshape(-1).astype(jnp.float32))
    out = _usad_call_impl(x, we1p, ws, bsl, wo, tile_b=8)
    ae1 = out[0, 0:n]
    ae2 = out[0, n_pad:n_pad + n]
    ae2ae1 = out[0, 2 * n_pad:2 * n_pad + n]
    return ae1, ae2, ae2ae1


@functools.partial(jax.jit, static_argnames=("feats", "tile_b"))
def usad_forward_batched(G, prepped, *, feats, tile_b=256):
    """Score B windows per call.  G: (B, n_window, feats) or (B, n).
    Returns (ae1, ae2, ae2ae1), each (B, n)."""
    we1p, ws, bsl, wo = prepped
    n = feats * N_WINDOW
    n_pad = we1p.shape[0]
    B = G.shape[0]
    tb = tile_b if B > tile_b else max(8, ((B + 7) // 8) * 8)
    b_pad = ((B + tb - 1) // tb) * tb
    x = jnp.zeros((b_pad, n_pad), jnp.float32)
    x = x.at[:B, :n].set(G.reshape(B, n).astype(jnp.float32))
    out = _usad_call_impl(x, we1p, ws, bsl, wo, tile_b=tb)
    ae1 = out[:B, 0:n]
    ae2 = out[:B, n_pad:n_pad + n]
    ae2ae1 = out[:B, 2 * n_pad:2 * n_pad + n]
    return ae1, ae2, ae2ae1


def init_params(key, feats):
    """PyTorch-Linear-style uniform init; weights stored as (in, out)."""
    n = feats * N_WINDOW
    dims = [
        (n, N_HIDDEN), (N_HIDDEN, N_HIDDEN), (N_HIDDEN, N_LATENT),   # encoder
        (N_LATENT, N_HIDDEN), (N_HIDDEN, N_HIDDEN), (N_HIDDEN, n),   # decoder1
        (N_LATENT, N_HIDDEN), (N_HIDDEN, N_HIDDEN), (N_HIDDEN, n),   # decoder2
    ]
    params = []
    for (din, dout) in dims:
        key, kw, kb = jax.random.split(key, 3)
        bound = 1.0 / jnp.sqrt(din)
        w = jax.random.uniform(kw, (din, dout), jnp.float32, -bound, bound)
        b = jax.random.uniform(kb, (1, dout), jnp.float32, -bound, bound)
        params.extend([w, b])
    return tuple(params)


def reference_forward(g, params, feats):
    """Pure-JAX (unfused) reference of the PyTorch forward."""
    n = feats * N_WINDOW
    x = g.reshape(1, n).astype(jnp.float32)
    (we1, be1, we2, be2, we3, be3,
     wd1_1, bd1_1, wd1_2, bd1_2, wd1_3, bd1_3,
     wd2_1, bd2_1, wd2_2, bd2_2, wd2_3, bd2_3) = params
    relu = lambda v: jnp.maximum(v, 0.0)

    def enc(h):
        h = relu(h @ we1 + be1)
        h = relu(h @ we2 + be2)
        return relu(h @ we3 + be3)

    def dec(h, w1, b1, w2, b2, w3, b3):
        h = relu(h @ w1 + b1)
        h = relu(h @ w2 + b2)
        return jax.nn.sigmoid(h @ w3 + b3)

    z = enc(x)
    ae1 = dec(z, wd1_1, bd1_1, wd1_2, bd1_2, wd1_3, bd1_3)
    ae2 = dec(z, wd2_1, bd2_1, wd2_2, bd2_2, wd2_3, bd2_3)
    ae2ae1 = dec(enc(ae1), wd2_1, bd2_1, wd2_2, bd2_2, wd2_3, bd2_3)
    return ae1.reshape(-1), ae2.reshape(-1), ae2ae1.reshape(-1)


if __name__ == "__main__":
    feats = 8                     # n = feats * n_window = 40
    n = feats * N_WINDOW
    key = jax.random.PRNGKey(0)
    kg, kp, kb = jax.random.split(key, 3)
    params = init_params(kp, feats)
    prepped = prepare_params(params, feats)   # one-time packing (out of hot path)

    # ---- single-window forward: exact module semantics ----
    g = jax.random.normal(kg, (N_WINDOW, feats), jnp.float32)
    ae1, ae2, ae2ae1 = usad_forward(g, prepped, feats=feats)
    jax.block_until_ready((ae1, ae2, ae2ae1))

    r1, r2, r3 = reference_forward(g, params, feats)
    assert ae1.shape == (n,) and ae2.shape == (n,) and ae2ae1.shape == (n,)
    assert jnp.allclose(ae1, r1, atol=2e-5), "ae1 mismatch vs reference"
    assert jnp.allclose(ae2, r2, atol=2e-5), "ae2 mismatch vs reference"
    assert jnp.allclose(ae2ae1, r3, atol=2e-5), "ae2ae1 mismatch vs reference"

    # ---- batched throughput path: many windows per call, parallel batch grid ----
    B = 300
    G = jax.random.normal(kb, (B, N_WINDOW, feats), jnp.float32)
    b1, b2, b3 = usad_forward_batched(G, prepped, feats=feats, tile_b=128)
    jax.block_until_ready((b1, b2, b3))

    ref_b = jax.vmap(lambda gg: reference_forward(gg, params, feats))(G)
    assert b1.shape == (B, n) and b2.shape == (B, n) and b3.shape == (B, n)
    assert jnp.allclose(b1, ref_b[0], atol=2e-5), "batched ae1 mismatch"
    assert jnp.allclose(b2, ref_b[1], atol=2e-5), "batched ae2 mismatch"
    assert jnp.allclose(b3, ref_b[2], atol=2e-5), "batched ae2ae1 mismatch"

    print("KERNEL_OK")
</pallas_src>

<mosaic_0001>
module attributes {stable_mosaic.version = 11 : i64} {
  func.func @_usad_kernel(%arg0: memref<8x128xf32, #tpu.memory_space<vmem>>, %arg1: memref<128x16xf32, #tpu.memory_space<vmem>>, %arg2: memref<96x32xf32, #tpu.memory_space<vmem>>, %arg3: memref<8x32xf32, #tpu.memory_space<vmem>>, %arg4: memref<34x128xf32, #tpu.memory_space<vmem>>, %arg5: memref<8x384xf32, #tpu.memory_space<vmem>>) attributes {dimension_semantics = [], scalar_prefetch = 0 : i64, scratch_operands = 0 : i64, tpu.core_type = #tpu.core_type<tc>} {
    %c0 = arith.constant 0 : index
    %c0_0 = arith.constant 0 : index
    %0 = vector.load %arg0[%c0, %c0_0] : memref<8x128xf32, #tpu.memory_space<vmem>>, vector<8x128xf32>
    %c0_1 = arith.constant 0 : index
    %c0_2 = arith.constant 0 : index
    %1 = vector.load %arg1[%c0_1, %c0_2] : memref<128x16xf32, #tpu.memory_space<vmem>>, vector<128x16xf32>
    %c0_3 = arith.constant 0 : index
    %c0_4 = arith.constant 0 : index
    %2 = vector.load %arg2[%c0_3, %c0_4] : memref<96x32xf32, #tpu.memory_space<vmem>>, vector<96x32xf32>
    %c0_5 = arith.constant 0 : index
    %c0_6 = arith.constant 0 : index
    %3 = vector.load %arg3[%c0_5, %c0_6] : memref<8x32xf32, #tpu.memory_space<vmem>>, vector<8x32xf32>
    %c0_7 = arith.constant 0 : index
    %c0_8 = arith.constant 0 : index
    %4 = vector.load %arg4[%c0_7, %c0_8] : memref<34x128xf32, #tpu.memory_space<vmem>>, vector<34x128xf32>
    %5 = vector.extract_strided_slice %2 {offsets = [0, 0], sizes = [16, 16], strides = [1, 1]} : vector<96x32xf32> to vector<16x16xf32>
    %6 = vector.extract_strided_slice %2 {offsets = [16, 0], sizes = [16, 5], strides = [1, 1]} : vector<96x32xf32> to vector<16x5xf32>
    %7 = vector.extract_strided_slice %2 {offsets = [32, 0], sizes = [5, 32], strides = [1, 1]} : vector<96x32xf32> to vector<5x32xf32>
    %8 = vector.extract_strided_slice %2 {offsets = [40, 0], sizes = [32, 32], strides = [1, 1]} : vector<96x32xf32> to vector<32x32xf32>
    %9 = vector.extract_strided_slice %2 {offsets = [72, 0], sizes = [5, 16], strides = [1, 1]} : vector<96x32xf32> to vector<5x16xf32>
    %10 = vector.extract_strided_slice %2 {offsets = [80, 0], sizes = [16, 16], strides = [1, 1]} : vector<96x32xf32> to vector<16x16xf32>
    %11 = vector.extract_strided_slice %3 {offsets = [0, 0], sizes = [1, 16], strides = [1, 1]} : vector<8x32xf32> to vector<1x16xf32>
    %12 = vector.extract_strided_slice %3 {offsets = [1, 0], sizes = [1, 16], strides = [1, 1]} : vector<8x32xf32> to vector<1x16xf32>
    %13 = vector.extract_strided_slice %3 {offsets = [2, 0], sizes = [1, 5], strides = [1, 1]} : vector<8x32xf32> to vector<1x5xf32>
    %14 = vector.extract_strided_slice %3 {offsets = [3, 0], sizes = [1, 32], strides = [1, 1]} : vector<8x32xf32> to vector<1x32xf32>
    %15 = vector.extract_strided_slice %3 {offsets = [4, 0], sizes = [1, 32], strides = [1, 1]} : vector<8x32xf32> to vector<1x32xf32>
    %16 = vector.extract_strided_slice %3 {offsets = [5, 0], sizes = [1, 16], strides = [1, 1]} : vector<8x32xf32> to vector<1x16xf32>
    %17 = vector.extract_strided_slice %3 {offsets = [6, 0], sizes = [1, 16], strides = [1, 1]} : vector<8x32xf32> to vector<1x16xf32>
    %18 = vector.extract_strided_slice %4 {offsets = [0, 0], sizes = [16, 128], strides = [1, 1]} : vector<34x128xf32> to vector<16x128xf32>
    %19 = vector.extract_strided_slice %4 {offsets = [16, 0], sizes = [16, 128], strides = [1, 1]} : vector<34x128xf32> to vector<16x128xf32>
    %20 = vector.extract_strided_slice %4 {offsets = [32, 0], sizes = [1, 128], strides = [1, 1]} : vector<34x128xf32> to vector<1x128xf32>
    %21 = vector.extract_strided_slice %4 {offsets = [33, 0], sizes = [1, 128], strides = [1, 1]} : vector<34x128xf32> to vector<1x128xf32>
    %cst = arith.constant dense<0.000000e+00> : vector<8x16xf32>
    %22 = tpu.matmul %0, %1, %cst {dimension_numbers = #tpu.dot_dimension_numbers<[1], [0], [0], [1], [0, 0, 1, 1], [], []>} : vector<8x128xf32>, vector<128x16xf32>, vector<8x16xf32> -> vector<8x16xf32>
    %23 = vector.broadcast %11 : vector<1x16xf32> to vector<8x16xf32>
    %24 = arith.addf %22, %23 : vector<8x16xf32>
    %cst_9 = arith.constant 0.000000e+00 : f32
    %25 = vector.broadcast %cst_9 : f32 to vector<8x16xf32>
    %26 = arith.maximumf %24, %25 : vector<8x16xf32>
    %cst_10 = arith.constant dense<0.000000e+00> : vector<8x16xf32>
    %27 = tpu.matmul %26, %5, %cst_10 {dimension_numbers = #tpu.dot_dimension_numbers<[1], [0], [0], [1], [0, 0, 1, 1], [], []>} : vector<8x16xf32>, vector<16x16xf32>, vector<8x16xf32> -> vector<8x16xf32>
    %28 = vector.broadcast %12 : vector<1x16xf32> to vector<8x16xf32>
    %29 = arith.addf %27, %28 : vector<8x16xf32>
    %cst_11 = arith.constant 0.000000e+00 : f32
    %30 = vector.broadcast %cst_11 : f32 to vector<8x16xf32>
    %31 = arith.maximumf %29, %30 : vector<8x16xf32>
    %cst_12 = arith.constant dense<0.000000e+00> : vector<8x5xf32>
    %32 = tpu.matmul %31, %6, %cst_12 {dimension_numbers = #tpu.dot_dimension_numbers<[1], [0], [0], [1], [0, 0, 1, 1], [], []>} : vector<8x16xf32>, vector<16x5xf32>, vector<8x5xf32> -> vector<8x5xf32>
    %33 = vector.broadcast %13 : vector<1x5xf32> to vector<8x5xf32>
    %34 = arith.addf %32, %33 : vector<8x5xf32>
    %cst_13 = arith.constant 0.000000e+00 : f32
    %35 = vector.broadcast %cst_13 : f32 to vector<8x5xf32>
    %36 = arith.maximumf %34, %35 : vector<8x5xf32>
    %cst_14 = arith.constant dense<0.000000e+00> : vector<8x32xf32>
    %37 = tpu.matmul %36, %7, %cst_14 {dimension_numbers = #tpu.dot_dimension_numbers<[1], [0], [0], [1], [0, 0, 1, 1], [], []>} : vector<8x5xf32>, vector<5x32xf32>, vector<8x32xf32> -> vector<8x32xf32>
    %38 = vector.broadcast %14 : vector<1x32xf32> to vector<8x32xf32>
    %39 = arith.addf %37, %38 : vector<8x32xf32>
    %cst_15 = arith.constant 0.000000e+00 : f32
    %40 = vector.broadcast %cst_15 : f32 to vector<8x32xf32>
    %41 = arith.maximumf %39, %40 : vector<8x32xf32>
    %cst_16 = arith.constant dense<0.000000e+00> : vector<8x32xf32>
    %42 = tpu.matmul %41, %8, %cst_16 {dimension_numbers = #tpu.dot_dimension_numbers<[1], [0], [0], [1], [0, 0, 1, 1], [], []>} : vector<8x32xf32>, vector<32x32xf32>, vector<8x32xf32> -> vector<8x32xf32>
    %43 = vector.broadcast %15 : vector<1x32xf32> to vector<8x32xf32>
    %44 = arith.addf %42, %43 : vector<8x32xf32>
    %cst_17 = arith.constant 0.000000e+00 : f32
    %45 = vector.broadcast %cst_17 : f32 to vector<8x32xf32>
    %46 = arith.maximumf %44, %45 : vector<8x32xf32>
    %47 = vector.extract_strided_slice %46 {offsets = [0, 0], sizes = [8, 16], strides = [1, 1]} : vector<8x32xf32> to vector<8x16xf32>
    %cst_18 = arith.constant dense<0.000000e+00> : vector<8x128xf32>
    %48 = tpu.matmul %47, %18, %cst_18 {dimension_numbers = #tpu.dot_dimension_numbers<[1], [0], [0], [1], [0, 0, 1, 1], [], []>} : vector<8x16xf32>, vector<16x128xf32>, vector<8x128xf32> -> vector<8x128xf32>
    %49 = vector.broadcast %20 : vector<1x128xf32> to vector<8x128xf32>
    %50 = arith.addf %48, %49 : vector<8x128xf32>
    %51 = arith.negf %50 : vector<8x128xf32>
    %52 = math.exp %51 : vector<8x128xf32>
    %cst_19 = arith.constant 1.000000e+00 : f32
    %53 = vector.broadcast %cst_19 : f32 to vector<8x128xf32>
    %54 = arith.addf %53, %52 : vector<8x128xf32>
    %55 = arith.divf %53, %54 : vector<8x128xf32>
    %56 = vector.extract_strided_slice %46 {offsets = [0, 16], sizes = [8, 16], strides = [1, 1]} : vector<8x32xf32> to vector<8x16xf32>
    %cst_20 = arith.constant dense<0.000000e+00> : vector<8x128xf32>
    %57 = tpu.matmul %56, %19, %cst_20 {dimension_numbers = #tpu.dot_dimension_numbers<[1], [0], [0], [1], [0, 0, 1, 1], [], []>} : vector<8x16xf32>, vector<16x128xf32>, vector<8x128xf32> -> vector<8x128xf32>
    %58 = vector.broadcast %21 : vector<1x128xf32> to vector<8x128xf32>
    %59 = arith.addf %57, %58 : vector<8x128xf32>
    %60 = arith.negf %59 : vector<8x128xf32>
    %61 = math.exp %60 : vector<8x128xf32>
    %cst_21 = arith.constant 1.000000e+00 : f32
    %62 = vector.broadcast %cst_21 : f32 to vector<8x128xf32>
    %63 = arith.addf %62, %61 : vector<8x128xf32>
    %64 = arith.divf %62, %63 : vector<8x128xf32>
    %cst_22 = arith.constant dense<0.000000e+00> : vector<8x16xf32>
    %65 = tpu.matmul %55, %1, %cst_22 {dimension_numbers = #tpu.dot_dimension_numbers<[1], [0], [0], [1], [0, 0, 1, 1], [], []>} : vector<8x128xf32>, vector<128x16xf32>, vector<8x16xf32> -> vector<8x16xf32>
    %66 = vector.broadcast %11 : vector<1x16xf32> to vector<8x16xf32>
    %67 = arith.addf %65, %66 : vector<8x16xf32>
    %cst_23 = arith.constant 0.000000e+00 : f32
    %68 = vector.broadcast %cst_23 : f32 to vector<8x16xf32>
    %69 = arith.maximumf %67, %68 : vector<8x16xf32>
    %cst_24 = arith.constant dense<0.000000e+00> : vector<8x16xf32>
    %70 = tpu.matmul %69, %5, %cst_24 {dimension_numbers = #tpu.dot_dimension_numbers<[1], [0], [0], [1], [0, 0, 1, 1], [], []>} : vector<8x16xf32>, vector<16x16xf32>, vector<8x16xf32> -> vector<8x16xf32>
    %71 = vector.broadcast %12 : vector<1x16xf32> to vector<8x16xf32>
    %72 = arith.addf %70, %71 : vector<8x16xf32>
    %cst_25 = arith.constant 0.000000e+00 : f32
    %73 = vector.broadcast %cst_25 : f32 to vector<8x16xf32>
    %74 = arith.maximumf %72, %73 : vector<8x16xf32>
    %cst_26 = arith.constant dense<0.000000e+00> : vector<8x5xf32>
    %75 = tpu.matmul %74, %6, %cst_26 {dimension_numbers = #tpu.dot_dimension_numbers<[1], [0], [0], [1], [0, 0, 1, 1], [], []>} : vector<8x16xf32>, vector<16x5xf32>, vector<8x5xf32> -> vector<8x5xf32>
    %76 = vector.broadcast %13 : vector<1x5xf32> to vector<8x5xf32>
    %77 = arith.addf %75, %76 : vector<8x5xf32>
    %cst_27 = arith.constant 0.000000e+00 : f32
    %78 = vector.broadcast %cst_27 : f32 to vector<8x5xf32>
    %79 = arith.maximumf %77, %78 : vector<8x5xf32>
    %cst_28 = arith.constant dense<0.000000e+00> : vector<8x16xf32>
    %80 = tpu.matmul %79, %9, %cst_28 {dimension_numbers = #tpu.dot_dimension_numbers<[1], [0], [0], [1], [0, 0, 1, 1], [], []>} : vector<8x5xf32>, vector<5x16xf32>, vector<8x16xf32> -> vector<8x16xf32>
    %81 = vector.broadcast %16 : vector<1x16xf32> to vector<8x16xf32>
    %82 = arith.addf %80, %81 : vector<8x16xf32>
    %cst_29 = arith.constant 0.000000e+00 : f32
    %83 = vector.broadcast %cst_29 : f32 to vector<8x16xf32>
    %84 = arith.maximumf %82, %83 : vector<8x16xf32>
    %cst_30 = arith.constant dense<0.000000e+00> : vector<8x16xf32>
    %85 = tpu.matmul %84, %10, %cst_30 {dimension_numbers = #tpu.dot_dimension_numbers<[1], [0], [0], [1], [0, 0, 1, 1], [], []>} : vector<8x16xf32>, vector<16x16xf32>, vector<8x16xf32> -> vector<8x16xf32>
    %86 = vector.broadcast %17 : vector<1x16xf32> to vector<8x16xf32>
    %87 = arith.addf %85, %86 : vector<8x16xf32>
    %cst_31 = arith.constant 0.000000e+00 : f32
    %88 = vector.broadcast %cst_31 : f32 to vector<8x16xf32>
    %89 = arith.maximumf %87, %88 : vector<8x16xf32>
    %cst_32 = arith.constant dense<0.000000e+00> : vector<8x128xf32>
    %90 = tpu.matmul %89, %19, %cst_32 {dimension_numbers = #tpu.dot_dimension_numbers<[1], [0], [0], [1], [0, 0, 1, 1], [], []>} : vector<8x16xf32>, vector<16x128xf32>, vector<8x128xf32> -> vector<8x128xf32>
    %91 = vector.broadcast %21 : vector<1x128xf32> to vector<8x128xf32>
    %92 = arith.addf %90, %91 : vector<8x128xf32>
    %93 = arith.negf %92 : vector<8x128xf32>
    %94 = math.exp %93 : vector<8x128xf32>
    %cst_33 = arith.constant 1.000000e+00 : f32
    %95 = vector.broadcast %cst_33 : f32 to vector<8x128xf32>
    %96 = arith.addf %95, %94 : vector<8x128xf32>
    %97 = arith.divf %95, %96 : vector<8x128xf32>
    %98 = tpu.concatenate %55, %64, %97 in 1 : vector<8x128xf32>, vector<8x128xf32>, vector<8x128xf32> -> vector<8x384xf32>
    %c0_34 = arith.constant 0 : index
    %c0_35 = arith.constant 0 : index
    %99 = vector.load %arg5[%c0_34, %c0_35] : memref<8x384xf32, #tpu.memory_space<vmem>>, vector<8x384xf32>
    tpu.vector_store %arg5[%c0_34, %c0_35], %98 {strides = array<i32>} : memref<8x384xf32, #tpu.memory_space<vmem>>, vector<8x384xf32>,
    return
  }
}

</mosaic_0001>

<llo_original>
// kernel: usad_forward.1
$region0: #{usad_forward.1}
  #allocation0 [shape = 'u32[]', space=smem, size = 0x4, offset = 0x4, fixed_abs, tag = 'smem constant byte address 0x4 - core index']
  #allocation1 [shape = 'u32[144,128]{1,0:T(1,128)}', space=vmem, size = 0x12000, scoped, tag = 'internal scratch']
  %s0 = inlined_call_operand.vmem [shape: f32[8,128], index: 0, kind: input, shape index: {}]
  %s1 = inlined_call_operand.vmem [shape: f32[128,16], index: 1, kind: input, shape index: {}]
  %s2 = inlined_call_operand.vmem [shape: f32[96,32], index: 2, kind: input, shape index: {}]
  %s3 = inlined_call_operand.vmem [shape: f32[8,32], index: 3, kind: input, shape index: {}]
  %s4 = inlined_call_operand.vmem [shape: f32[34,128], index: 4, kind: input, shape index: {}]
  %s5 = inlined_call_operand.vmem [shape: f32[8,384], index: 5, kind: output, shape index: {}]
  %s6 = sld [smem:[#allocation0]]
  $region30: #{usad_forward.1} parent=0
    _
  %s8 = ssub.s32 1, %s6
  %s9 = scalar_select 0, %s8, %s6
  // Predicated region
  $region2: #{usad_forward.1} parent=0 // pred_check
    _
  $region3: #{usad_forward.1} parent=0 // pred_check_branch
    %11 = sbr.rel (0) target = $region5
  $region4: #{usad_forward.1} parent=0 // pred_region
    _
  $region5: #{usad_forward.1} parent=0 // pred_fallthru
    _
  // Predicated region
  $region6: #{usad_forward.1} parent=0 // pred_check
    _
  $region7: #{usad_forward.1} parent=0 // pred_check_branch
    %13 = sbr.rel (0) target = $region9
  $region8: #{usad_forward.1} parent=0 // pred_region
    _
  $region9: #{usad_forward.1} parent=0 // pred_fallthru
    _
  // Predicated region
  $region10: #{usad_forward.1} parent=0 // pred_check
    _
  $region11: #{usad_forward.1} parent=0 // pred_check_branch
    %15 = sbr.rel (0) target = $region13
  $region12: #{usad_forward.1} parent=0 // pred_region
    _
  $region13: #{usad_forward.1} parent=0 // pred_fallthru
    _
  // Predicated region
  $region14: #{usad_forward.1} parent=0 // pred_check
    _
  $region15: #{usad_forward.1} parent=0 // pred_check_branch
    %17 = sbr.rel (0) target = $region17
  $region16: #{usad_forward.1} parent=0 // pred_region
    _
  $region17: #{usad_forward.1} parent=0 // pred_fallthru
    _
  // Predicated region
  $region18: #{usad_forward.1} parent=0 // pred_check
    _
  $region19: #{usad_forward.1} parent=0 // pred_check_branch
    %19 = sbr.rel (0) target = $region21
  $region20: #{usad_forward.1} parent=0 // pred_region
    _
  $region21: #{usad_forward.1} parent=0 // pred_fallthru
    _
  %v20 = vld [vmem:[%s0] sm:$0xff]
  %v21 = vld [vmem:[%s1] sm:$0xff]
  %v22 = vld [vmem:[%s1 + $0x8] sm:$0xff]
  %v23 = vld [vmem:[%s1 + $0x10] sm:$0xff]
  %v24 = vld [vmem:[%s1 + $0x18] sm:$0xff]
  %v25 = vld [vmem:[%s1 + $0x20] sm:$0xff]
  %v26 = vld [vmem:[%s1 + $0x28] sm:$0xff]
  %v27 = vld [vmem:[%s1 + $0x30] sm:$0xff]
  %v28 = vld [vmem:[%s1 + $0x38] sm:$0xff]
  %v29 = vld [vmem:[%s1 + $0x40] sm:$0xff]
  %v30 = vld [vmem:[%s1 + $0x48] sm:$0xff]
  %v31 = vld [vmem:[%s1 + $0x50] sm:$0xff]
  %v32 = vld [vmem:[%s1 + $0x58] sm:$0xff]
  %v33 = vld [vmem:[%s1 + $0x60] sm:$0xff]
  %v34 = vld [vmem:[%s1 + $0x68] sm:$0xff]
  %v35 = vld [vmem:[%s1 + $0x70] sm:$0xff]
  %v36 = vld [vmem:[%s1 + $0x78] sm:$0xff]
  %v37 = vld [vmem:[%s2] sm:$0xff]
  %v38 = vld [vmem:[%s2 + $0x8] sm:$0xff]
  %v39 = vld [vmem:[%s2 + $0x10] sm:$0xff]
  %v40 = vld [vmem:[%s2 + $0x18] sm:$0xff]
  %v41 = vld [vmem:[%s2 + $0x20] sm:$0xff]
  %v42 = vld [vmem:[%s2 + $0x28] sm:$0xff]
  %v43 = vld [vmem:[%s2 + $0x30] sm:$0xff]
  %v44 = vld [vmem:[%s2 + $0x38] sm:$0xff]
  %v45 = vld [vmem:[%s2 + $0x40] sm:$0xff]
  %v46 = vld [vmem:[%s2 + $0x48] sm:$0xff]
  %v47 = vld [vmem:[%s2 + $0x50] sm:$0xff]
  %v48 = vld [vmem:[%s2 + $0x58] sm:$0xff]
  %v49 = vld [vmem:[%s3] sm:$0xff]
  %v50 = vld [vmem:[%s4] sm:$0xff]
  %v51 = vld [vmem:[%s4 + $0x8] sm:$0xff]
  %v52 = vld [vmem:[%s4 + $0x10] sm:$0xff]
  %v53 = vld [vmem:[%s4 + $0x18] sm:$0xff]
  %v54 = vld [vmem:[%s4 + $0x20] sm:$0x3]
  %v55 = vlaneseq
  %v56 = vshrl.u32 %v55, 7
  %v57 = vsub.s32 0, %v56
  %v58 = vrot.slane %v49, %v57
  %59 = vmatprep.subr.mxu0 0.0
  %60 = vmatpush1.msra.mxu0 %v36
  %61 = vmatprep.subr.mxu0 0.0
  %62 = vmatpush1.msra.mxu0 %v35
  %63 = vmatprep.subr.mxu0 0.0
  %64 = vmatpush1.msra.mxu0 %v34
  %65 = vmatprep.subr.mxu0 0.0
  %66 = vmatpush1.msra.mxu0 %v33
  %67 = vmatprep.subr.mxu0 0.0
  %68 = vmatpush1.msra.mxu0 %v32
  %69 = vmatprep.subr.mxu0 0.0
  %70 = vmatpush1.msra.mxu0 %v31
  %71 = vmatprep.subr.mxu0 0.0
  %72 = vmatpush1.msra.mxu0 %v30
  %73 = vmatprep.subr.mxu0 0.0
  %74 = vmatpush1.msra.mxu0 %v29
  %75 = vmatprep.subr.mxu0 0.0
  %76 = vmatpush1.msra.mxu0 %v28
  %77 = vmatprep.subr.mxu0 0.0
  %78 = vmatpush1.msra.mxu0 %v27
  %79 = vmatprep.subr.mxu0 0.0
  %80 = vmatpush1.msra.mxu0 %v26
  %81 = vmatprep.subr.mxu0 0.0
  %82 = vmatpush1.msra.mxu0 %v25
  %83 = vmatprep.subr.mxu0 0.0
  %84 = vmatpush1.msra.mxu0 %v24
  %85 = vmatprep.subr.mxu0 0.0
  %86 = vmatpush1.msra.mxu0 %v23
  %87 = vmatprep.subr.mxu0 0.0
  %88 = vmatpush1.msra.mxu0 %v22
  %89 = vmatprep.subr.mxu0 0.0
  %90 = vmatpush1.msra.mxu0 %v21
  %91 = vmatprep.subr.mxu0 0.0
  %92 = vmatpush2.msra.mxu0 0.0
  %93 = vmatprep.subr.mxu0 0.0
  %94 = vmatpush2.msra.mxu0 0.0
  %95 = vmatprep.subr.mxu0 0.0
  %96 = vmatpush2.msra.mxu0 0.0
  %97 = vmatprep.subr.mxu0 0.0
  %98 = vmatpush2.msra.mxu0 0.0
  %99 = vmatprep.subr.mxu0 0.0
  %100 = vmatpush2.msra.mxu0 0.0
  %101 = vmatprep.subr.mxu0 0.0
  %102 = vmatpush2.msra.mxu0 0.0
  %103 = vmatprep.subr.mxu0 0.0
  %104 = vmatpush2.msra.mxu0 0.0
  %105 = vmatprep.subr.mxu0 0.0
  %106 = vmatpush2.msra.mxu0 0.0
  %107 = vmatprep.subr.mxu0 0.0
  %108 = vmatpush2.msra.mxu0 0.0
  %109 = vmatprep.subr.mxu0 0.0
  %110 = vmatpush2.msra.mxu0 0.0
  %111 = vmatprep.subr.mxu0 0.0
  %112 = vmatpush2.msra.mxu0 0.0
  %113 = vmatprep.subr.mxu0 0.0
  %114 = vmatpush2.msra.mxu0 0.0
  %115 = vmatprep.subr.mxu0 0.0
  %116 = vmatpush2.msra.mxu0 0.0
  %117 = vmatprep.subr.mxu0 0.0
  %118 = vmatpush2.msra.mxu0 0.0
  %119 = vmatprep.subr.mxu0 0.0
  %120 = vmatpush2.msra.mxu0 0.0
  %121 = vmatprep.subr.mxu0 0.0
  %122 = vmatpush2.msra.mxu0 0.0
  %123 = vmatprep.mubr.f32.mxu0 0.0
  %124 = vmatmul.mubr.f32.gmra.mxu0 %v20
  %v125 = vpop.f32.mrf.mxu0
  %v126 = vadd.f32 %v58, %v125
  %v127 = vpop.f32.mrf.mxu0
  %128 = vdwg.mxu0
  %v129 = vmax.f32 %v126, 0.0
  %v130 = vlaneseq
  %v131 = vshrl.u32 %v130, 7
  %v132 = vsub.s32 1, %v131
  %v133 = vrot.slane %v49, %v132
  %vm134 = vcmask 130048
  %v136 = vsel %vm134, %v129, 0
  %138 = vmatprep.subr.mxu0 0.0
  %139 = vmatpush1.msra.mxu0 0.0
  %140 = vmatprep.subr.mxu0 0.0
  %141 = vmatpush1.msra.mxu0 0.0
  %142 = vmatprep.subr.mxu0 0.0
  %143 = vmatpush1.msra.mxu0 0.0
  %144 = vmatprep.subr.mxu0 0.0
  %145 = vmatpush1.msra.mxu0 0.0
  %146 = vmatprep.subr.mxu0 0.0
  %147 = vmatpush1.msra.mxu0 0.0
  %148 = vmatprep.subr.mxu0 0.0
  %149 = vmatpush1.msra.mxu0 0.0
  %150 = vmatprep.subr.mxu0 0.0
  %151 = vmatpush1.msra.mxu0 0.0
  %152 = vmatprep.subr.mxu0 0.0
  %153 = vmatpush1.msra.mxu0 0.0
  %154 = vmatprep.subr.mxu0 0.0
  %155 = vmatpush1.msra.mxu0 0.0
  %156 = vmatprep.subr.mxu0 0.0
  %157 = vmatpush1.msra.mxu0 0.0
  %158 = vmatprep.subr.mxu0 0.0
  %159 = vmatpush1.msra.mxu0 0.0
  %160 = vmatprep.subr.mxu0 0.0
  %161 = vmatpush1.msra.mxu0 0.0
  %162 = vmatprep.subr.mxu0 0.0
  %163 = vmatpush1.msra.mxu0 0.0
  %164 = vmatprep.subr.mxu0 0.0
  %165 = vmatpush1.msra.mxu0 0.0
  %166 = vmatprep.subr.mxu0 0.0
  %167 = vmatpush1.msra.mxu0 %v38
  %168 = vmatprep.subr.mxu0 0.0
  %169 = vmatpush1.msra.mxu0 %v37
  %170 = vmatprep.subr.mxu0 0.0
  %171 = vmatpush2.msra.mxu0 0.0
  %172 = vmatprep.subr.mxu0 0.0
  %173 = vmatpush2.msra.mxu0 0.0
  %174 = vmatprep.subr.mxu0 0.0
  %175 = vmatpush2.msra.mxu0 0.0
  %176 = vmatprep.subr.mxu0 0.0
  %177 = vmatpush2.msra.mxu0 0.0
  %178 = vmatprep.subr.mxu0 0.0
  %179 = vmatpush2.msra.mxu0 0.0
  %180 = vmatprep.subr.mxu0 0.0
  %181 = vmatpush2.msra.mxu0 0.0
  %182 = vmatprep.subr.mxu0 0.0
  %183 = vmatpush2.msra.mxu0 0.0
  %184 = vmatprep.subr.mxu0 0.0
  %185 = vmatpush2.msra.mxu0 0.0
  %186 = vmatprep.subr.mxu0 0.0
  %187 = vmatpush2.msra.mxu0 0.0
  %188 = vmatprep.subr.mxu0 0.0
  %189 = vmatpush2.msra.mxu0 0.0
  %190 = vmatprep.subr.mxu0 0.0
  %191 = vmatpush2.msra.mxu0 0.0
  %192 = vmatprep.subr.mxu0 0.0
  %193 = vmatpush2.msra.mxu0 0.0
  %194 = vmatprep.subr.mxu0 0.0
  %195 = vmatpush2.msra.mxu0 0.0
  %196 = vmatprep.subr.mxu0 0.0
  %197 = vmatpush2.msra.mxu0 0.0
  %198 = vmatprep.subr.mxu0 0.0
  %199 = vmatpush2.msra.mxu0 0.0
  %200 = vmatprep.subr.mxu0 0.0
  %201 = vmatpush2.msra.mxu0 0.0
  %202 = vmatprep.mubr.f32.mxu0 0.0
  %203 = vmatmul.mubr.f32.gmra.mxu0 %v136
  %v204 = vpop.f32.mrf.mxu0
  %v205 = vadd.f32 %v133, %v204
  %v206 = vpop.f32.mrf.mxu0
  %207 = vdwg.mxu0
  %v208 = vmax.f32 %v205, 0.0
  %v209 = vlaneseq
  %v210 = vshrl.u32 %v209, 7
  %v211 = vsub.s32 2, %v210
  %v212 = vrot.slane %v49, %v211
  %v214 = vsel %vm134, %v208, 0
  %216 = vmatprep.subr.mxu0 0.0
  %217 = vmatpush1.msra.mxu0 0.0
  %218 = vmatprep.subr.mxu0 0.0
  %219 = vmatpush1.msra.mxu0 0.0
  %220 = vmatprep.subr.mxu0 0.0
  %221 = vmatpush1.msra.mxu0 0.0
  %222 = vmatprep.subr.mxu0 0.0
  %223 = vmatpush1.msra.mxu0 0.0
  %224 = vmatprep.subr.mxu0 0.0
  %225 = vmatpush1.msra.mxu0 0.0
  %226 = vmatprep.subr.mxu0 0.0
  %227 = vmatpush1.msra.mxu0 0.0
  %228 = vmatprep.subr.mxu0 0.0
  %229 = vmatpush1.msra.mxu0 0.0
  %230 = vmatprep.subr.mxu0 0.0
  %231 = vmatpush1.msra.mxu0 0.0
  %232 = vmatprep.subr.mxu0 0.0
  %233 = vmatpush1.msra.mxu0 0.0
  %234 = vmatprep.subr.mxu0 0.0
  %235 = vmatpush1.msra.mxu0 0.0
  %236 = vmatprep.subr.mxu0 0.0
  %237 = vmatpush1.msra.mxu0 0.0
  %238 = vmatprep.subr.mxu0 0.0
  %239 = vmatpush1.msra.mxu0 0.0
  %240 = vmatprep.subr.mxu0 0.0
  %241 = vmatpush1.msra.mxu0 0.0
  %242 = vmatprep.subr.mxu0 0.0
  %243 = vmatpush1.msra.mxu0 0.0
  %244 = vmatprep.subr.mxu0 0.0
  %245 = vmatpush1.msra.mxu0 %v40
  %246 = vmatprep.subr.mxu0 0.0
  %247 = vmatpush1.msra.mxu0 %v39
  %248 = vmatprep.subr.mxu0 0.0
  %249 = vmatpush2.msra.mxu0 0.0
  %250 = vmatprep.subr.mxu0 0.0
  %251 = vmatpush2.msra.mxu0 0.0
  %252 = vmatprep.subr.mxu0 0.0
  %253 = vmatpush2.msra.mxu0 0.0
  %254 = vmatprep.subr.mxu0 0.0
  %255 = vmatpush2.msra.mxu0 0.0
  %256 = vmatprep.subr.mxu0 0.0
  %257 = vmatpush2.msra.mxu0 0.0
  %258 = vmatprep.subr.mxu0 0.0
  %259 = vmatpush2.msra.mxu0 0.0
  %260 = vmatprep.subr.mxu0 0.0
  %261 = vmatpush2.msra.mxu0 0.0
  %262 = vmatprep.subr.mxu0 0.0
  %263 = vmatpush2.msra.mxu0 0.0
  %264 = vmatprep.subr.mxu0 0.0
  %265 = vmatpush2.msra.mxu0 0.0
  %266 = vmatprep.subr.mxu0 0.0
  %267 = vmatpush2.msra.mxu0 0.0
  %268 = vmatprep.subr.mxu0 0.0
  %269 = vmatpush2.msra.mxu0 0.0
  %270 = vmatprep.subr.mxu0 0.0
  %271 = vmatpush2.msra.mxu0 0.0
  %272 = vmatprep.subr.mxu0 0.0
  %273 = vmatpush2.msra.mxu0 0.0
  %274 = vmatprep.subr.mxu0 0.0
  %275 = vmatpush2.msra.mxu0 0.0
  %276 = vmatprep.subr.mxu0 0.0
  %277 = vmatpush2.msra.mxu0 0.0
  %278 = vmatprep.subr.mxu0 0.0
  %279 = vmatpush2.msra.mxu0 0.0
  %280 = vmatprep.mubr.f32.mxu0 0.0
  %281 = vmatmul.mubr.f32.gmra.mxu0 %v214
  %v282 = vpop.f32.mrf.mxu0
  %v283 = vadd.f32 %v212, %v282
  %v284 = vpop.f32.mrf.mxu0
  %285 = vdwg.mxu0
  %v286 = vmax.f32 %v283, 0.0
  %v287 = vlaneseq
  %v288 = vshrl.u32 %v287, 7
  %v289 = vsub.s32 3, %v288
  %v290 = vrot.slane %v49, %v289
  %vm291 = vcmask 39936
  %v293 = vsel %vm291, %v286, 0
  %vm295 = vcmask 1044480
  %v297 = vsel %vm295, %v41, 0
  %299 = vmatprep.subr.mxu0 0.0
  %300 = vmatpush1.msra.mxu0 0.0
  %301 = vmatprep.subr.mxu0 0.0
  %302 = vmatpush1.msra.mxu0 0.0
  %303 = vmatprep.subr.mxu0 0.0
  %304 = vmatpush1.msra.mxu0 0.0
  %305 = vmatprep.subr.mxu0 0.0
  %306 = vmatpush1.msra.mxu0 0.0
  %307 = vmatprep.subr.mxu0 0.0
  %308 = vmatpush1.msra.mxu0 0.0
  %309 = vmatprep.subr.mxu0 0.0
  %310 = vmatpush1.msra.mxu0 0.0
  %311 = vmatprep.subr.mxu0 0.0
  %312 = vmatpush1.msra.mxu0 0.0
  %313 = vmatprep.subr.mxu0 0.0
  %314 = vmatpush1.msra.mxu0 0.0
  %315 = vmatprep.subr.mxu0 0.0
  %316 = vmatpush1.msra.mxu0 0.0
  %317 = vmatprep.subr.mxu0 0.0
  %318 = vmatpush1.msra.mxu0 0.0
  %319 = vmatprep.subr.mxu0 0.0
  %320 = vmatpush1.msra.mxu0 0.0
  %321 = vmatprep.subr.mxu0 0.0
  %322 = vmatpush1.msra.mxu0 0.0
  %323 = vmatprep.subr.mxu0 0.0
  %324 = vmatpush1.msra.mxu0 0.0
  %325 = vmatprep.subr.mxu0 0.0
  %326 = vmatpush1.msra.mxu0 0.0
  %327 = vmatprep.subr.mxu0 0.0
  %328 = vmatpush1.msra.mxu0 0.0
  %329 = vmatprep.subr.mxu0 0.0
  %330 = vmatpush1.msra.mxu0 %v297
  %331 = vmatprep.subr.mxu0 0.0
  %332 = vmatpush2.msra.mxu0 0.0
  %333 = vmatprep.subr.mxu0 0.0
  %334 = vmatpush2.msra.mxu0 0.0
  %335 = vmatprep.subr.mxu0 0.0
  %336 = vmatpush2.msra.mxu0 0.0
  %337 = vmatprep.subr.mxu0 0.0
  %338 = vmatpush2.msra.mxu0 0.0
  %339 = vmatprep.subr.mxu0 0.0
  %340 = vmatpush2.msra.mxu0 0.0
  %341 = vmatprep.subr.mxu0 0.0
  %342 = vmatpush2.msra.mxu0 0.0
  %343 = vmatprep.subr.mxu0 0.0
  %344 = vmatpush2.msra.mxu0 0.0
  %345 = vmatprep.subr.mxu0 0.0
  %346 = vmatpush2.msra.mxu0 0.0
  %347 = vmatprep.subr.mxu0 0.0
  %348 = vmatpush2.msra.mxu0 0.0
  %349 = vmatprep.subr.mxu0 0.0
  %350 = vmatpush2.msra.mxu0 0.0
  %351 = vmatprep.subr.mxu0 0.0
  %352 = vmatpush2.msra.mxu0 0.0
  %353 = vmatprep.subr.mxu0 0.0
  %354 = vmatpush2.msra.mxu0 0.0
  %355 = vmatprep.subr.mxu0 0.0
  %356 = vmatpush2.msra.mxu0 0.0
  %357 = vmatprep.subr.mxu0 0.0
  %358 = vmatpush2.msra.mxu0 0.0
  %359 = vmatprep.subr.mxu0 0.0
  %360 = vmatpush2.msra.mxu0 0.0
  %361 = vmatprep.subr.mxu0 0.0
  %362 = vmatpush2.msra.mxu0 0.0
  %363 = vmatprep.mubr.f32.mxu0 0.0
  %364 = vmatmul.mubr.f32.gmra.mxu0 %v293
  %v365 = vpop.f32.mrf.mxu0
  %v366 = vadd.f32 %v290, %v365
  %v367 = vpop.f32.mrf.mxu0
  %368 = vdwg.mxu0
  %v369 = vmax.f32 %v366, 0.0
  %v370 = vlaneseq
  %v371 = vshrl.u32 %v370, 7
  %v372 = vsub.s32 4, %v371
  %v373 = vrot.slane %v49, %v372
  %vm374 = vcmask 261120
  %v376 = vsel %vm374, %v369, 0
  %378 = vmatprep.subr.mxu0 0.0
  %379 = vmatpush1.msra.mxu0 0.0
  %380 = vmatprep.subr.mxu0 0.0
  %381 = vmatpush1.msra.mxu0 0.0
  %382 = vmatprep.subr.mxu0 0.0
  %383 = vmatpush1.msra.mxu0 0.0
  %384 = vmatprep.subr.mxu0 0.0
  %385 = vmatpush1.msra.mxu0 0.0
  %386 = vmatprep.subr.mxu0 0.0
  %387 = vmatpush1.msra.mxu0 0.0
  %388 = vmatprep.subr.mxu0 0.0
  %389 = vmatpush1.msra.mxu0 0.0
  %390 = vmatprep.subr.mxu0 0.0
  %391 = vmatpush1.msra.mxu0 0.0
  %392 = vmatprep.subr.mxu0 0.0
  %393 = vmatpush1.msra.mxu0 0.0
  %394 = vmatprep.subr.mxu0 0.0
  %395 = vmatpush1.msra.mxu0 0.0
  %396 = vmatprep.subr.mxu0 0.0
  %397 = vmatpush1.msra.mxu0 0.0
  %398 = vmatprep.subr.mxu0 0.0
  %399 = vmatpush1.msra.mxu0 0.0
  %400 = vmatprep.subr.mxu0 0.0
  %401 = vmatpush1.msra.mxu0 0.0
  %402 = vmatprep.subr.mxu0 0.0
  %403 = vmatpush1.msra.mxu0 %v45
  %404 = vmatprep.subr.mxu0 0.0
  %405 = vmatpush1.msra.mxu0 %v44
  %406 = vmatprep.subr.mxu0 0.0
  %407 = vmatpush1.msra.mxu0 %v43
  %408 = vmatprep.subr.mxu0 0.0
  %409 = vmatpush1.msra.mxu0 %v42
  %410 = vmatprep.subr.mxu0 0.0
  %411 = vmatpush2.msra.mxu0 0.0
  %412 = vmatprep.subr.mxu0 0.0
  %413 = vmatpush2.msra.mxu0 0.0
  %414 = vmatprep.subr.mxu0 0.0
  %415 = vmatpush2.msra.mxu0 0.0
  %416 = vmatprep.subr.mxu0 0.0
  %417 = vmatpush2.msra.mxu0 0.0
  %418 = vmatprep.subr.mxu0 0.0
  %419 = vmatpush2.msra.mxu0 0.0
  %420 = vmatprep.subr.mxu0 0.0
  %421 = vmatpush2.msra.mxu0 0.0
  %422 = vmatprep.subr.mxu0 0.0
  %423 = vmatpush2.msra.mxu0 0.0
  %424 = vmatprep.subr.mxu0 0.0
  %425 = vmatpush2.msra.mxu0 0.0
  %426 = vmatprep.subr.mxu0 0.0
  %427 = vmatpush2.msra.mxu0 0.0
  %428 = vmatprep.subr.mxu0 0.0
  %429 = vmatpush2.msra.mxu0 0.0
  %430 = vmatprep.subr.mxu0 0.0
  %431 = vmatpush2.msra.mxu0 0.0
  %432 = vmatprep.subr.mxu0 0.0
  %433 = vmatpush2.msra.mxu0 0.0
  %434 = vmatprep.subr.mxu0 0.0
  %435 = vmatpush2.msra.mxu0 0.0
  %436 = vmatprep.subr.mxu0 0.0
  %437 = vmatpush2.msra.mxu0 0.0
  %438 = vmatprep.subr.mxu0 0.0
  %439 = vmatpush2.msra.mxu0 0.0
  %440 = vmatprep.subr.mxu0 0.0
  %441 = vmatpush2.msra.mxu0 0.0
  %442 = vmatprep.mubr.f32.mxu0 0.0
  %443 = vmatmul.mubr.f32.gmra.mxu0 %v376
  %v444 = vpop.f32.mrf.mxu0
  %v445 = vadd.f32 %v373, %v444
  %v446 = vpop.f32.mrf.mxu0
  %447 = vdwg.mxu0
  %v448 = vmax.f32 %v445, 0.0
  %v449 = vlaneseq
  %v450 = vshrl.u32 %v449, 7
  %v451 = vsub.s32 0, %v450
  %v452 = vrot.slane %v54, %v451
  %v454 = vsel %vm134, %v448, 0
  %456 = vmatprep.subr.mxu0 0.0
  %457 = vmatpush1.msra.mxu0 0.0
  %458 = vmatprep.subr.mxu0 0.0
  %459 = vmatpush1.msra.mxu0 0.0
  %460 = vmatprep.subr.mxu0 0.0
  %461 = vmatpush1.msra.mxu0 0.0
  %462 = vmatprep.subr.mxu0 0.0
  %463 = vmatpush1.msra.mxu0 0.0
  %464 = vmatprep.subr.mxu0 0.0
  %465 = vmatpush1.msra.mxu0 0.0
  %466 = vmatprep.subr.mxu0 0.0
  %467 = vmatpush1.msra.mxu0 0.0
  %468 = vmatprep.subr.mxu0 0.0
  %469 = vmatpush1.msra.mxu0 0.0
  %470 = vmatprep.subr.mxu0 0.0
  %471 = vmatpush1.msra.mxu0 0.0
  %472 = vmatprep.subr.mxu0 0.0
  %473 = vmatpush1.msra.mxu0 0.0
  %474 = vmatprep.subr.mxu0 0.0
  %475 = vmatpush1.msra.mxu0 0.0
  %476 = vmatprep.subr.mxu0 0.0
  %477 = vmatpush1.msra.mxu0 0.0
  %478 = vmatprep.subr.mxu0 0.0
  %479 = vmatpush1.msra.mxu0 0.0
  %480 = vmatprep.subr.mxu0 0.0
  %481 = vmatpush1.msra.mxu0 0.0
  %482 = vmatprep.subr.mxu0 0.0
  %483 = vmatpush1.msra.mxu0 0.0
  %484 = vmatprep.subr.mxu0 0.0
  %485 = vmatpush1.msra.mxu0 %v51
  %486 = vmatprep.subr.mxu0 0.0
  %487 = vmatpush1.msra.mxu0 %v50
  %488 = vmatprep.subr.mxu0 0.0
  %489 = vmatpush2.msra.mxu0 0.0
  %490 = vmatprep.subr.mxu0 0.0
  %491 = vmatpush2.msra.mxu0 0.0
  %492 = vmatprep.subr.mxu0 0.0
  %493 = vmatpush2.msra.mxu0 0.0
  %494 = vmatprep.subr.mxu0 0.0
  %495 = vmatpush2.msra.mxu0 0.0
  %496 = vmatprep.subr.mxu0 0.0
  %497 = vmatpush2.msra.mxu0 0.0
  %498 = vmatprep.subr.mxu0 0.0
  %499 = vmatpush2.msra.mxu0 0.0
  %500 = vmatprep.subr.mxu0 0.0
  %501 = vmatpush2.msra.mxu0 0.0
  %502 = vmatprep.subr.mxu0 0.0
  %503 = vmatpush2.msra.mxu0 0.0
  %504 = vmatprep.subr.mxu0 0.0
  %505 = vmatpush2.msra.mxu0 0.0
  %506 = vmatprep.subr.mxu0 0.0
  %507 = vmatpush2.msra.mxu0 0.0
  %508 = vmatprep.subr.mxu0 0.0
  %509 = vmatpush2.msra.mxu0 0.0
  %510 = vmatprep.subr.mxu0 0.0
  %511 = vmatpush2.msra.mxu0 0.0
  %512 = vmatprep.subr.mxu0 0.0
  %513 = vmatpush2.msra.mxu0 0.0
  %514 = vmatprep.subr.mxu0 0.0
  %515 = vmatpush2.msra.mxu0 0.0
  %516 = vmatprep.subr.mxu0 0.0
  %517 = vmatpush2.msra.mxu0 0.0
  %518 = vmatprep.subr.mxu0 0.0
  %519 = vmatpush2.msra.mxu0 0.0
  %520 = vmatprep.mubr.f32.mxu0 0.0
  %521 = vmatmul.mubr.f32.gmra.mxu0 %v454
  %v522 = vpop.f32.mrf.mxu0
  %v523 = vadd.f32 %v452, %v522
  %v524 = vpop.f32.mrf.mxu0
  %525 = vdwg.mxu0
  %v526 = vxor.u32 %v523, 2147483648
  %v527 = vmul.f32 %v526, 1.442695
  %v528 = vpow.pop %v527
  %v529 = vadd.f32 %v528, 1.0
  %v530 = vrcp.pop %v529
  %v531 = vmul.f32 1.0, %v530
  %v532 = vlaneseq
  %v533 = vshrl.u32 %v532, 7
  %v534 = vsub.s32 1, %v533
  %v535 = vrot.slane %v54, %v534
  %536 = vrot.lane.b32.xlu0 %v448, 112
  %v537 = vpop.permute.xlu0 %536
  %v538 = vsel %vm134, %v537, 0
  %540 = vmatprep.subr.mxu0 0.0
  %541 = vmatpush1.msra.mxu0 0.0
  %542 = vmatprep.subr.mxu0 0.0
  %543 = vmatpush1.msra.mxu0 0.0
  %544 = vmatprep.subr.mxu0 0.0
  %545 = vmatpush1.msra.mxu0 0.0
  %546 = vmatprep.subr.mxu0 0.0
  %547 = vmatpush1.msra.mxu0 0.0
  %548 = vmatprep.subr.mxu0 0.0
  %549 = vmatpush1.msra.mxu0 0.0
  %550 = vmatprep.subr.mxu0 0.0
  %551 = vmatpush1.msra.mxu0 0.0
  %552 = vmatprep.subr.mxu0 0.0
  %553 = vmatpush1.msra.mxu0 0.0
  %554 = vmatprep.subr.mxu0 0.0
  %555 = vmatpush1.msra.mxu0 0.0
  %556 = vmatprep.subr.mxu0 0.0
  %557 = vmatpush1.msra.mxu0 0.0
  %558 = vmatprep.subr.mxu0 0.0
  %559 = vmatpush1.msra.mxu0 0.0
  %560 = vmatprep.subr.mxu0 0.0
  %561 = vmatpush1.msra.mxu0 0.0
  %562 = vmatprep.subr.mxu0 0.0
  %563 = vmatpush1.msra.mxu0 0.0
  %564 = vmatprep.subr.mxu0 0.0
  %565 = vmatpush1.msra.mxu0 0.0
  %566 = vmatprep.subr.mxu0 0.0
  %567 = vmatpush1.msra.mxu0 0.0
  %568 = vmatprep.subr.mxu0 0.0
  %569 = vmatpush1.msra.mxu0 %v53
  %570 = vmatprep.subr.mxu0 0.0
  %571 = vmatpush1.msra.mxu0 %v52
  %572 = vmatprep.subr.mxu0 0.0
  %573 = vmatpush2.msra.mxu0 0.0
  %574 = vmatprep.subr.mxu0 0.0
  %575 = vmatpush2.msra.mxu0 0.0
  %576 = vmatprep.subr.mxu0 0.0
  %577 = vmatpush2.msra.mxu0 0.0
  %578 = vmatprep.subr.mxu0 0.0
  %579 = vmatpush2.msra.mxu0 0.0
  %580 = vmatprep.subr.mxu0 0.0
  %581 = vmatpush2.msra.mxu0 0.0
  %582 = vmatprep.subr.mxu0 0.0
  %583 = vmatpush2.msra.mxu0 0.0
  %584 = vmatprep.subr.mxu0 0.0
  %585 = vmatpush2.msra.mxu0 0.0
  %586 = vmatprep.subr.mxu0 0.0
  %587 = vmatpush2.msra.mxu0 0.0
  %588 = vmatprep.subr.mxu0 0.0
  %589 = vmatpush2.msra.mxu0 0.0
  %590 = vmatprep.subr.mxu0 0.0
  %591 = vmatpush2.msra.mxu0 0.0
  %592 = vmatprep.subr.mxu0 0.0
  %593 = vmatpush2.msra.mxu0 0.0
  %594 = vmatprep.subr.mxu0 0.0
  %595 = vmatpush2.msra.mxu0 0.0
  %596 = vmatprep.subr.mxu0 0.0
  %597 = vmatpush2.msra.mxu0 0.0
  %598 = vmatprep.subr.mxu0 0.0
  %599 = vmatpush2.msra.mxu0 0.0
  %600 = vmatprep.subr.mxu0 0.0
  %601 = vmatpush2.msra.mxu0 0.0
  %602 = vmatprep.subr.mxu0 0.0
  %603 = vmatpush2.msra.mxu0 0.0
  %604 = vmatprep.mubr.f32.mxu0 0.0
  %605 = vmatmul.mubr.f32.gmra.mxu0 %v538
  %v606 = vpop.f32.mrf.mxu0
  %v607 = vadd.f32 %v535, %v606
  %v608 = vpop.f32.mrf.mxu0
  %609 = vdwg.mxu0
  %v610 = vxor.u32 %v607, 2147483648
  %v611 = vmul.f32 %v610, 1.442695
  %v612 = vpow.pop %v611
  %v613 = vadd.f32 %v612, 1.0
  %v614 = vrcp.pop %v613
  %v615 = vmul.f32 1.0, %v614
  %616 = vmatprep.subr.mxu0 0.0
  %617 = vmatpush1.msra.mxu0 %v36
  %618 = vmatprep.subr.mxu0 0.0
  %619 = vmatpush1.msra.mxu0 %v35
  %620 = vmatprep.subr.mxu0 0.0
  %621 = vmatpush1.msra.mxu0 %v34
  %622 = vmatprep.subr.mxu0 0.0
  %623 = vmatpush1.msra.mxu0 %v33
  %624 = vmatprep.subr.mxu0 0.0
  %625 = vmatpush1.msra.mxu0 %v32
  %626 = vmatprep.subr.mxu0 0.0
  %627 = vmatpush1.msra.mxu0 %v31
  %628 = vmatprep.subr.mxu0 0.0
  %629 = vmatpush1.msra.mxu0 %v30
  %630 = vmatprep.subr.mxu0 0.0
  %631 = vmatpush1.msra.mxu0 %v29
  %632 = vmatprep.subr.mxu0 0.0
  %633 = vmatpush1.msra.mxu0 %v28
  %634 = vmatprep.subr.mxu0 0.0
  %635 = vmatpush1.msra.mxu0 %v27
  %636 = vmatprep.subr.mxu0 0.0
  %637 = vmatpush1.msra.mxu0 %v26
  %638 = vmatprep.subr.mxu0 0.0
  %639 = vmatpush1.msra.mxu0 %v25
  %640 = vmatprep.subr.mxu0 0.0
  %641 = vmatpush1.msra.mxu0 %v24
  %642 = vmatprep.subr.mxu0 0.0
  %643 = vmatpush1.msra.mxu0 %v23
  %644 = vmatprep.subr.mxu0 0.0
  %645 = vmatpush1.msra.mxu0 %v22
  %646 = vmatprep.subr.mxu0 0.0
  %647 = vmatpush1.msra.mxu0 %v21
  %648 = vmatprep.subr.mxu0 0.0
  %649 = vmatpush2.msra.mxu0 0.0
  %650 = vmatprep.subr.mxu0 0.0
  %651 = vmatpush2.msra.mxu0 0.0
  %652 = vmatprep.subr.mxu0 0.0
  %653 = vmatpush2.msra.mxu0 0.0
  %654 = vmatprep.subr.mxu0 0.0
  %655 = vmatpush2.msra.mxu0 0.0
  %656 = vmatprep.subr.mxu0 0.0
  %657 = vmatpush2.msra.mxu0 0.0
  %658 = vmatprep.subr.mxu0 0.0
  %659 = vmatpush2.msra.mxu0 0.0
  %660 = vmatprep.subr.mxu0 0.0
  %661 = vmatpush2.msra.mxu0 0.0
  %662 = vmatprep.subr.mxu0 0.0
  %663 = vmatpush2.msra.mxu0 0.0
  %664 = vmatprep.subr.mxu0 0.0
  %665 = vmatpush2.msra.mxu0 0.0
  %666 = vmatprep.subr.mxu0 0.0
  %667 = vmatpush2.msra.mxu0 0.0
  %668 = vmatprep.subr.mxu0 0.0
  %669 = vmatpush2.msra.mxu0 0.0
  %670 = vmatprep.subr.mxu0 0.0
  %671 = vmatpush2.msra.mxu0 0.0
  %672 = vmatprep.subr.mxu0 0.0
  %673 = vmatpush2.msra.mxu0 0.0
  %674 = vmatprep.subr.mxu0 0.0
  %675 = vmatpush2.msra.mxu0 0.0
  %676 = vmatprep.subr.mxu0 0.0
  %677 = vmatpush2.msra.mxu0 0.0
  %678 = vmatprep.subr.mxu0 0.0
  %679 = vmatpush2.msra.mxu0 0.0
  %680 = vmatprep.mubr.f32.mxu0 0.0
  %681 = vmatmul.mubr.f32.gmra.mxu0 %v531
  %v682 = vpop.f32.mrf.mxu0
  %v683 = vadd.f32 %v58, %v682
  %v684 = vpop.f32.mrf.mxu0
  %685 = vdwg.mxu0
  %v686 = vmax.f32 %v683, 0.0
  %v688 = vsel %vm134, %v686, 0
  %690 = vmatprep.subr.mxu0 0.0
  %691 = vmatpush1.msra.mxu0 0.0
  %692 = vmatprep.subr.mxu0 0.0
  %693 = vmatpush1.msra.mxu0 0.0
  %694 = vmatprep.subr.mxu0 0.0
  %695 = vmatpush1.msra.mxu0 0.0
  %696 = vmatprep.subr.mxu0 0.0
  %697 = vmatpush1.msra.mxu0 0.0
  %698 = vmatprep.subr.mxu0 0.0
  %699 = vmatpush1.msra.mxu0 0.0
  %700 = vmatprep.subr.mxu0 0.0
  %701 = vmatpush1.msra.mxu0 0.0
  %702 = vmatprep.subr.mxu0 0.0
  %703 = vmatpush1.msra.mxu0 0.0
  %704 = vmatprep.subr.mxu0 0.0
  %705 = vmatpush1.msra.mxu0 0.0
  %706 = vmatprep.subr.mxu0 0.0
  %707 = vmatpush1.msra.mxu0 0.0
  %708 = vmatprep.subr.mxu0 0.0
  %709 = vmatpush1.msra.mxu0 0.0
  %710 = vmatprep.subr.mxu0 0.0
  %711 = vmatpush1.msra.mxu0 0.0
  %712 = vmatprep.subr.mxu0 0.0
  %713 = vmatpush1.msra.mxu0 0.0
  %714 = vmatprep.subr.mxu0 0.0
  %715 = vmatpush1.msra.mxu0 0.0
  %716 = vmatprep.subr.mxu0 0.0
  %717 = vmatpush1.msra.mxu0 0.0
  %718 = vmatprep.subr.mxu0 0.0
  %719 = vmatpush1.msra.mxu0 %v38
  %720 = vmatprep.subr.mxu0 0.0
  %721 = vmatpush1.msra.mxu0 %v37
  %722 = vmatprep.subr.mxu0 0.0
  %723 = vmatpush2.msra.mxu0 0.0
  %724 = vmatprep.subr.mxu0 0.0
  %725 = vmatpush2.msra.mxu0 0.0
  %726 = vmatprep.subr.mxu0 0.0
  %727 = vmatpush2.msra.mxu0 0.0
  %728 = vmatprep.subr.mxu0 0.0
  %729 = vmatpush2.msra.mxu0 0.0
  %730 = vmatprep.subr.mxu0 0.0
  %731 = vmatpush2.msra.mxu0 0.0
  %732 = vmatprep.subr.mxu0 0.0
  %733 = vmatpush2.msra.mxu0 0.0
  %734 = vmatprep.subr.mxu0 0.0
  %735 = vmatpush2.msra.mxu0 0.0
  %736 = vmatprep.subr.mxu0 0.0
  %737 = vmatpush2.msra.mxu0 0.0
  %738 = vmatprep.subr.mxu0 0.0
  %739 = vmatpush2.msra.mxu0 0.0
  %740 = vmatprep.subr.mxu0 0.0
  %741 = vmatpush2.msra.mxu0 0.0
  %742 = vmatprep.subr.mxu0 0.0
  %743 = vmatpush2.msra.mxu0 0.0
  %744 = vmatprep.subr.mxu0 0.0
  %745 = vmatpush2.msra.mxu0 0.0
  %746 = vmatprep.subr.mxu0 0.0
  %747 = vmatpush2.msra.mxu0 0.0
  %748 = vmatprep.subr.mxu0 0.0
  %749 = vmatpush2.msra.mxu0 0.0
  %750 = vmatprep.subr.mxu0 0.0
  %751 = vmatpush2.msra.mxu0 0.0
  %752 = vmatprep.subr.mxu0 0.0
  %753 = vmatpush2.msra.mxu0 0.0
  %754 = vmatprep.mubr.f32.mxu0 0.0
  %755 = vmatmul.mubr.f32.gmra.mxu0 %v688
  %v756 = vpop.f32.mrf.mxu0
  %v757 = vadd.f32 %v133, %v756
  %v758 = vpop.f32.mrf.mxu0
  %759 = vdwg.mxu0
  %v760 = vmax.f32 %v757, 0.0
  %v762 = vsel %vm134, %v760, 0
  %764 = vmatprep.subr.mxu0 0.0
  %765 = vmatpush1.msra.mxu0 0.0
  %766 = vmatprep.subr.mxu0 0.0
  %767 = vmatpush1.msra.mxu0 0.0
  %768 = vmatprep.subr.mxu0 0.0
  %769 = vmatpush1.msra.mxu0 0.0
  %770 = vmatprep.subr.mxu0 0.0
  %771 = vmatpush1.msra.mxu0 0.0
  %772 = vmatprep.subr.mxu0 0.0
  %773 = vmatpush1.msra.mxu0 0.0
  %774 = vmatprep.subr.mxu0 0.0
  %775 = vmatpush1.msra.mxu0 0.0
  %776 = vmatprep.subr.mxu0 0.0
  %777 = vmatpush1.msra.mxu0 0.0
  %778 = vmatprep.subr.mxu0 0.0
  %779 = vmatpush1.msra.mxu0 0.0
  %780 = vmatprep.subr.mxu0 0.0
  %781 = vmatpush1.msra.mxu0 0.0
  %782 = vmatprep.subr.mxu0 0.0
  %783 = vmatpush1.msra.mxu0 0.0
  %784 = vmatprep.subr.mxu0 0.0
  %785 = vmatpush1.msra.mxu0 0.0
  %786 = vmatprep.subr.mxu0 0.0
  %787 = vmatpush1.msra.mxu0 0.0
  %788 = vmatprep.subr.mxu0 0.0
  %789 = vmatpush1.msra.mxu0 0.0
  %790 = vmatprep.subr.mxu0 0.0
  %791 = vmatpush1.msra.mxu0 0.0
  %792 = vmatprep.subr.mxu0 0.0
  %793 = vmatpush1.msra.mxu0 %v40
  %794 = vmatprep.subr.mxu0 0.0
  %795 = vmatpush1.msra.mxu0 %v39
  %796 = vmatprep.subr.mxu0 0.0
  %797 = vmatpush2.msra.mxu0 0.0
  %798 = vmatprep.subr.mxu0 0.0
  %799 = vmatpush2.msra.mxu0 0.0
  %800 = vmatprep.subr.mxu0 0.0
  %801 = vmatpush2.msra.mxu0 0.0
  %802 = vmatprep.subr.mxu0 0.0
  %803 = vmatpush2.msra.mxu0 0.0
  %804 = vmatprep.subr.mxu0 0.0
  %805 = vmatpush2.msra.mxu0 0.0
  %806 = vmatprep.subr.mxu0 0.0
  %807 = vmatpush2.msra.mxu0 0.0
  %808 = vmatprep.subr.mxu0 0.0
  %809 = vmatpush2.msra.mxu0 0.0
  %810 = vmatprep.subr.mxu0 0.0
  %811 = vmatpush2.msra.mxu0 0.0
  %812 = vmatprep.subr.mxu0 0.0
  %813 = vmatpush2.msra.mxu0 0.0
  %814 = vmatprep.subr.mxu0 0.0
  %815 = vmatpush2.msra.mxu0 0.0
  %816 = vmatprep.subr.mxu0 0.0
  %817 = vmatpush2.msra.mxu0 0.0
  %818 = vmatprep.subr.mxu0 0.0
  %819 = vmatpush2.msra.mxu0 0.0
  %820 = vmatprep.subr.mxu0 0.0
  %821 = vmatpush2.msra.mxu0 0.0
  %822 = vmatprep.subr.mxu0 0.0
  %823 = vmatpush2.msra.mxu0 0.0
  %824 = vmatprep.subr.mxu0 0.0
  %825 = vmatpush2.msra.mxu0 0.0
  %826 = vmatprep.subr.mxu0 0.0
  %827 = vmatpush2.msra.mxu0 0.0
  %828 = vmatprep.mubr.f32.mxu0 0.0
  %829 = vmatmul.mubr.f32.gmra.mxu0 %v762
  %v830 = vpop.f32.mrf.mxu0
  %v831 = vadd.f32 %v212, %v830
  %v832 = vpop.f32.mrf.mxu0
  %833 = vdwg.mxu0
  %v834 = vmax.f32 %v831, 0.0
  %v835 = vlaneseq
  %v836 = vshrl.u32 %v835, 7
  %v837 = vsub.s32 5, %v836
  %v838 = vrot.slane %v49, %v837
  %v840 = vsel %vm291, %v834, 0
  %v843 = vsel %vm295, %v46, 0
  %845 = vmatprep.subr.mxu0 0.0
  %846 = vmatpush1.msra.mxu0 0.0
  %847 = vmatprep.subr.mxu0 0.0
  %848 = vmatpush1.msra.mxu0 0.0
  %849 = vmatprep.subr.mxu0 0.0
  %850 = vmatpush1.msra.mxu0 0.0
  %851 = vmatprep.subr.mxu0 0.0
  %852 = vmatpush1.msra.mxu0 0.0
  %853 = vmatprep.subr.mxu0 0.0
  %854 = vmatpush1.msra.mxu0 0.0
  %855 = vmatprep.subr.mxu0 0.0
  %856 = vmatpush1.msra.mxu0 0.0
  %857 = vmatprep.subr.mxu0 0.0
  %858 = vmatpush1.msra.mxu0 0.0
  %859 = vmatprep.subr.mxu0 0.0
  %860 = vmatpush1.msra.mxu0 0.0
  %861 = vmatprep.subr.mxu0 0.0
  %862 = vmatpush1.msra.mxu0 0.0
  %863 = vmatprep.subr.mxu0 0.0
  %864 = vmatpush1.msra.mxu0 0.0
  %865 = vmatprep.subr.mxu0 0.0
  %866 = vmatpush1.msra.mxu0 0.0
  %867 = vmatprep.subr.mxu0 0.0
  %868 = vmatpush1.msra.mxu0 0.0
  %869 = vmatprep.subr.mxu0 0.0
  %870 = vmatpush1.msra.mxu0 0.0
  %871 = vmatprep.subr.mxu0 0.0
  %872 = vmatpush1.msra.mxu0 0.0
  %873 = vmatprep.subr.mxu0 0.0
  %874 = vmatpush1.msra.mxu0 0.0
  %875 = vmatprep.subr.mxu0 0.0
  %876 = vmatpush1.msra.mxu0 %v843
  %877 = vmatprep.subr.mxu0 0.0
  %878 = vmatpush2.msra.mxu0 0.0
  %879 = vmatprep.subr.mxu0 0.0
  %880 = vmatpush2.msra.mxu0 0.0
  %881 = vmatprep.subr.mxu0 0.0
  %882 = vmatpush2.msra.mxu0 0.0
  %883 = vmatprep.subr.mxu0 0.0
  %884 = vmatpush2.msra.mxu0 0.0
  %885 = vmatprep.subr.mxu0 0.0
  %886 = vmatpush2.msra.mxu0 0.0
  %887 = vmatprep.subr.mxu0 0.0
  %888 = vmatpush2.msra.mxu0 0.0
  %889 = vmatprep.subr.mxu0 0.0
  %890 = vmatpush2.msra.mxu0 0.0
  %891 = vmatprep.subr.mxu0 0.0
  %892 = vmatpush2.msra.mxu0 0.0
  %893 = vmatprep.subr.mxu0 0.0
  %894 = vmatpush2.msra.mxu0 0.0
  %895 = vmatprep.subr.mxu0 0.0
  %896 = vmatpush2.msra.mxu0 0.0
  %897 = vmatprep.subr.mxu0 0.0
  %898 = vmatpush2.msra.mxu0 0.0
  %899 = vmatprep.subr.mxu0 0.0
  %900 = vmatpush2.msra.mxu0 0.0
  %901 = vmatprep.subr.mxu0 0.0
  %902 = vmatpush2.msra.mxu0 0.0
  %903 = vmatprep.subr.mxu0 0.0
  %904 = vmatpush2.msra.mxu0 0.0
  %905 = vmatprep.subr.mxu0 0.0
  %906 = vmatpush2.msra.mxu0 0.0
  %907 = vmatprep.subr.mxu0 0.0
  %908 = vmatpush2.msra.mxu0 0.0
  %909 = vmatprep.mubr.f32.mxu0 0.0
  %910 = vmatmul.mubr.f32.gmra.mxu0 %v840
  %v911 = vpop.f32.mrf.mxu0
  %v912 = vadd.f32 %v838, %v911
  %v913 = vpop.f32.mrf.mxu0
  %914 = vdwg.mxu0
  %v915 = vmax.f32 %v912, 0.0
  %v916 = vlaneseq
  %v917 = vshrl.u32 %v916, 7
  %v918 = vsub.s32 6, %v917
  %v919 = vrot.slane %v49, %v918
  %v921 = vsel %vm134, %v915, 0
  %923 = vmatprep.subr.mxu0 0.0
  %924 = vmatpush1.msra.mxu0 0.0
  %925 = vmatprep.subr.mxu0 0.0
  %926 = vmatpush1.msra.mxu0 0.0
  %927 = vmatprep.subr.mxu0 0.0
  %928 = vmatpush1.msra.mxu0 0.0
  %929 = vmatprep.subr.mxu0 0.0
  %930 = vmatpush1.msra.mxu0 0.0
  %931 = vmatprep.subr.mxu0 0.0
  %932 = vmatpush1.msra.mxu0 0.0
  %933 = vmatprep.subr.mxu0 0.0
  %934 = vmatpush1.msra.mxu0 0.0
  %935 = vmatprep.subr.mxu0 0.0
  %936 = vmatpush1.msra.mxu0 0.0
  %937 = vmatprep.subr.mxu0 0.0
  %938 = vmatpush1.msra.mxu0 0.0
  %939 = vmatprep.subr.mxu0 0.0
  %940 = vmatpush1.msra.mxu0 0.0
  %941 = vmatprep.subr.mxu0 0.0
  %942 = vmatpush1.msra.mxu0 0.0
  %943 = vmatprep.subr.mxu0 0.0
  %944 = vmatpush1.msra.mxu0 0.0
  %945 = vmatprep.subr.mxu0 0.0
  %946 = vmatpush1.msra.mxu0 0.0
  %947 = vmatprep.subr.mxu0 0.0
  %948 = vmatpush1.msra.mxu0 0.0
  %949 = vmatprep.subr.mxu0 0.0
  %950 = vmatpush1.msra.mxu0 0.0
  %951 = vmatprep.subr.mxu0 0.0
  %952 = vmatpush1.msra.mxu0 %v48
  %953 = vmatprep.subr.mxu0 0.0
  %954 = vmatpush1.msra.mxu0 %v47
  %955 = vmatprep.subr.mxu0 0.0
  %956 = vmatpush2.msra.mxu0 0.0
  %957 = vmatprep.subr.mxu0 0.0
  %958 = vmatpush2.msra.mxu0 0.0
  %959 = vmatprep.subr.mxu0 0.0
  %960 = vmatpush2.msra.mxu0 0.0
  %961 = vmatprep.subr.mxu0 0.0
  %962 = vmatpush2.msra.mxu0 0.0
  %963 = vmatprep.subr.mxu0 0.0
  %964 = vmatpush2.msra.mxu0 0.0
  %965 = vmatprep.subr.mxu0 0.0
  %966 = vmatpush2.msra.mxu0 0.0
  %967 = vmatprep.subr.mxu0 0.0
  %968 = vmatpush2.msra.mxu0 0.0
  %969 = vmatprep.subr.mxu0 0.0
  %970 = vmatpush2.msra.mxu0 0.0
  %971 = vmatprep.subr.mxu0 0.0
  %972 = vmatpush2.msra.mxu0 0.0
  %973 = vmatprep.subr.mxu0 0.0
  %974 = vmatpush2.msra.mxu0 0.0
  %975 = vmatprep.subr.mxu0 0.0
  %976 = vmatpush2.msra.mxu0 0.0
  %977 = vmatprep.subr.mxu0 0.0
  %978 = vmatpush2.msra.mxu0 0.0
  %979 = vmatprep.subr.mxu0 0.0
  %980 = vmatpush2.msra.mxu0 0.0
  %981 = vmatprep.subr.mxu0 0.0
  %982 = vmatpush2.msra.mxu0 0.0
  %983 = vmatprep.subr.mxu0 0.0
  %984 = vmatpush2.msra.mxu0 0.0
  %985 = vmatprep.subr.mxu0 0.0
  %986 = vmatpush2.msra.mxu0 0.0
  %987 = vmatprep.mubr.f32.mxu0 0.0
  %988 = vmatmul.mubr.f32.gmra.mxu0 %v921
  %v989 = vpop.f32.mrf.mxu0
  %v990 = vadd.f32 %v919, %v989
  %v991 = vpop.f32.mrf.mxu0
  %992 = vdwg.mxu0
  %v993 = vmax.f32 %v990, 0.0
  %v995 = vsel %vm134, %v993, 0
  %997 = vmatprep.subr.mxu0 0.0
  %998 = vmatpush1.msra.mxu0 0.0
  %999 = vmatprep.subr.mxu0 0.0
  %1000 = vmatpush1.msra.mxu0 0.0
  %1001 = vmatprep.subr.mxu0 0.0
  %1002 = vmatpush1.msra.mxu0 0.0
  %1003 = vmatprep.subr.mxu0 0.0
  %1004 = vmatpush1.msra.mxu0 0.0
  %1005 = vmatprep.subr.mxu0 0.0
  %1006 = vmatpush1.msra.mxu0 0.0
  %1007 = vmatprep.subr.mxu0 0.0
  %1008 = vmatpush1.msra.mxu0 0.0
  %1009 = vmatprep.subr.mxu0 0.0
  %1010 = vmatpush1.msra.mxu0 0.0
  %1011 = vmatprep.subr.mxu0 0.0
  %1012 = vmatpush1.msra.mxu0 0.0
  %1013 = vmatprep.subr.mxu0 0.0
  %1014 = vmatpush1.msra.mxu0 0.0
  %1015 = vmatprep.subr.mxu0 0.0
  %1016 = vmatpush1.msra.mxu0 0.0
  %1017 = vmatprep.subr.mxu0 0.0
  %1018 = vmatpush1.msra.mxu0 0.0
  %1019 = vmatprep.subr.mxu0 0.0
  %1020 = vmatpush1.msra.mxu0 0.0
  %1021 = vmatprep.subr.mxu0 0.0
  %1022 = vmatpush1.msra.mxu0 0.0
  %1023 = vmatprep.subr.mxu0 0.0
  %1024 = vmatpush1.msra.mxu0 0.0
  %1025 = vmatprep.subr.mxu0 0.0
  %1026 = vmatpush1.msra.mxu0 %v53
  %1027 = vmatprep.subr.mxu0 0.0
  %1028 = vmatpush1.msra.mxu0 %v52
  %1029 = vmatprep.subr.mxu0 0.0
  %1030 = vmatpush2.msra.mxu0 0.0
  %1031 = vmatprep.subr.mxu0 0.0
  %1032 = vmatpush2.msra.mxu0 0.0
  %1033 = vmatprep.subr.mxu0 0.0
  %1034 = vmatpush2.msra.mxu0 0.0
  %1035 = vmatprep.subr.mxu0 0.0
  %1036 = vmatpush2.msra.mxu0 0.0
  %1037 = vmatprep.subr.mxu0 0.0
  %1038 = vmatpush2.msra.mxu0 0.0
  %1039 = vmatprep.subr.mxu0 0.0
  %1040 = vmatpush2.msra.mxu0 0.0
  %1041 = vmatprep.subr.mxu0 0.0
  %1042 = vmatpush2.msra.mxu0 0.0
  %1043 = vmatprep.subr.mxu0 0.0
  %1044 = vmatpush2.msra.mxu0 0.0
  %1045 = vmatprep.subr.mxu0 0.0
  %1046 = vmatpush2.msra.mxu0 0.0
  %1047 = vmatprep.subr.mxu0 0.0
  %1048 = vmatpush2.msra.mxu0 0.0
  %1049 = vmatprep.subr.mxu0 0.0
  %1050 = vmatpush2.msra.mxu0 0.0
  %1051 = vmatprep.subr.mxu0 0.0
  %1052 = vmatpush2.msra.mxu0 0.0
  %1053 = vmatprep.subr.mxu0 0.0
  %1054 = vmatpush2.msra.mxu0 0.0
  %1055 = vmatprep.subr.mxu0 0.0
  %1056 = vmatpush2.msra.mxu0 0.0
  %1057 = vmatprep.subr.mxu0 0.0
  %1058 = vmatpush2.msra.mxu0 0.0
  %1059 = vmatprep.subr.mxu0 0.0
  %1060 = vmatpush2.msra.mxu0 0.0
  %1061 = vmatprep.mubr.f32.mxu0 0.0
  %1062 = vmatmul.mubr.f32.gmra.mxu0 %v995
  %v1063 = vpop.f32.mrf.mxu0
  %v1064 = vadd.f32 %v535, %v1063
  %v1065 = vpop.f32.mrf.mxu0
  %1066 = vdwg.mxu0
  %v1067 = vxor.u32 %v1064, 2147483648
  %v1068 = vmul.f32 %v1067, 1.442695
  %v1069 = vpow.pop %v1068
  %v1070 = vadd.f32 %v1069, 1.0
  %v1071 = vrcp.pop %v1070
  %v1072 = vmul.f32 1.0, %v1071
  %1073 = vst [vmem:[%s5] sm:$0xff] %v531
  %1074 = vst [vmem:[%s5 + $0x8] sm:$0xff] %v615
  %1075 = vst [vmem:[%s5 + $0x10] sm:$0xff] %v1072
  // Predicated region
  $region22: #{usad_forward.1} parent=0 // pred_check
    _
  $region23: #{usad_forward.1} parent=0 // pred_check_branch
    %1077 = sbr.rel (0) target = $region25
  $region24: #{usad_forward.1} parent=0 // pred_region
    _
  $region25: #{usad_forward.1} parent=0 // pred_fallthru
    _
  // Predicated region
  $region26: #{usad_forward.1} parent=0 // pred_check
    _
  $region27: #{usad_forward.1} parent=0 // pred_check_branch
    %1079 = sbr.rel (0) target = $region29
  $region28: #{usad_forward.1} parent=0 // pred_region
    _
  $region29: #{usad_forward.1} parent=0 // pred_fallthru
    _

</llo_original>
